<compile_context>
chip_gen: v7x
topology: tpu7x:2x2x1
jax: 0.10.0
libtpu: 0.0.40
codegen_flags: <defaults>
</compile_context>

<pallas_src>
import functools
import math

import jax
import jax.numpy as jnp
from jax.experimental import pallas as pl
from jax.experimental.pallas import tpu as pltpu


def _round_up(x, m):
    return (x + m - 1) // m * m


# ---------------------------------------------------------------------------
# Kernels
# ---------------------------------------------------------------------------

def _cos_kernel(x_ref, w_ref, cos_ref):
    """cos tile: (tile_b, E)bf16 @ (E, tile_c)bf16 -> (tile_b, tile_c)f32."""
    cos_ref[...] = jnp.dot(x_ref[...], w_ref[...],
                           preferred_element_type=jnp.float32).astype(cos_ref.dtype)


def _cos_loss_kernel(bias_ref, x_ref, w_ref, ms_ref, label_ref, *out_refs,
                     s, l, tile_c, num_classes, emit_cos, mask_padded):
    """Fused cosine + dynamic-margin unified-CE loss for one (batch, class) tile.

    bias_ref : (1,)        f32 SMEM (scalar prefetch)  learnable scalar bias
    x_ref    : (tile_b, E) bf16   normalized embeddings
    w_ref    : (E, tile_c) bf16   normalized class weights (lane-dense classes)
    ms_ref   : (1, tile_c) f32    per-class m_l * s (margin pre-folded with s)
    label_ref: (tile_b, 1) int32  class labels
    out_refs : (cos_ref, rowloss_ref) if emit_cos else (rowloss_ref,)
    """
    if emit_cos:
        cos_ref, rowloss_ref = out_refs
    else:
        (rowloss_ref,) = out_refs

    ci = pl.program_id(1)
    bias = bias_ref[0]

    cos = jnp.dot(x_ref[...], w_ref[...], preferred_element_type=jnp.float32)
    if emit_cos:
        cos_ref[...] = cos.astype(cos_ref.dtype)

    cols = ci * tile_c + jax.lax.broadcasted_iota(jnp.int32, cos.shape, 1)
    labels = label_ref[...]                                # (tile_b, 1)
    one_hot = cols == labels                               # (tile_b, tile_c)

    # Negative branch only, per element (single exp + log on the EUP).
    neg_pre = cos * s - bias
    neg_loss = jnp.log(1.0 + jnp.exp(jnp.clip(neg_pre, -s, s))) * l
    if mask_padded:
        neg_loss = jnp.where(cols < num_classes, neg_loss, 0.0)
    row_neg = jnp.sum(neg_loss, axis=1, keepdims=True)     # (tile_b, 1)

    # Per-row fixup: swap the single labeled column's neg term for its pos term.
    lab_neg_pre = jnp.sum(jnp.where(one_hot, neg_pre, 0.0), axis=1, keepdims=True)
    lab_ms = jnp.sum(jnp.where(one_hot, ms_ref[...], 0.0), axis=1, keepdims=True)
    pos_loss_lab = jnp.log(1.0 + jnp.exp(-jnp.clip(lab_neg_pre - lab_ms, -s, s)))
    neg_loss_lab = jnp.log(1.0 + jnp.exp(jnp.clip(lab_neg_pre, -s, s))) * l
    in_tile = (labels >= ci * tile_c) & (labels < (ci + 1) * tile_c)
    fixup = jnp.where(in_tile, pos_loss_lab - neg_loss_lab, 0.0)

    @pl.when(ci == 0)
    def _():
        rowloss_ref[...] = jnp.zeros_like(rowloss_ref)

    rowloss_ref[...] += row_neg + fixup


# ---------------------------------------------------------------------------
# Hoisted (per-weight-update, not per-forward) preparation
# ---------------------------------------------------------------------------

def prepare_weight(weight, *, eps=1e-5, dtype=jnp.bfloat16):
    """F.normalize(weight, p=2, dim=1, eps) -> (E, C) lane-dense, MXU dtype."""
    norm = jnp.sqrt(jnp.sum(weight * weight, axis=1, keepdims=True))
    w_norm = weight / jnp.maximum(norm, eps)
    return jnp.transpose(w_norm, (1, 0)).astype(dtype)


def prepare_margins(class_counts, *, a=0.5, lambda_=0.25, b=0.05, s=64.0):
    """Pre-folded margins: (a * n_i^{-lambda} + b) * s, laid out as (1, C) f32."""
    counts = jnp.asarray(class_counts, dtype=jnp.float32)
    return ((a * counts ** (-lambda_) + b) * s).reshape(1, -1)


# ---------------------------------------------------------------------------
# Forward
# ---------------------------------------------------------------------------

def dm_uce_forward(x, w_prep, m_s, bias, label=None, *,
                   s=64.0, l=1.0, tile_b=None, tile_c=2048, eps=1e-5,
                   cos_dtype=jnp.float32, return_cos=True):
    """Pallas equivalent of DynamicMargin_Unified_Cross_Entropy_Loss_V2.forward.

    w_prep: prepare_weight(weight)   (E, C) bf16
    m_s:    prepare_margins(counts, s=s)  (1, C) f32  (= m_l * s)
    """
    B, E = x.shape
    E2, C = w_prep.shape
    assert E == E2, "embedding dims of x and prepared weight must match"

    # ---- class tiling: lane-dense tiles, minimal padding of C ----
    tile_c = max(128, int(tile_c))
    c128 = _round_up(C, 128)
    n_ct = max(1, -(-c128 // tile_c))
    tile_c = _round_up(-(-c128 // n_ct), 128)
    C_pad = n_ct * tile_c
    mask_padded = C_pad != C

    cos_bytes = 4 if label is None else (
        jnp.dtype(cos_dtype).itemsize if return_cos else 0)

    # ---- batch tiling: biggest tile inside the VMEM budget. Every extra batch
    # tile re-streams the full bf16 weight matrix, so prefer a single tile. ----
    if tile_b is None:
        tile_b = 512
    tile_b = max(8, _round_up(min(int(tile_b), _round_up(B, 8)), 8))

    def _vmem_est(tb):
        # double-buffered per-step working set
        return 2 * (tb * E * 2                  # x   (bf16)
                    + E * tile_c * 2            # w   (bf16)
                    + 8 * tile_c * 4            # m_s (sublane-padded)
                    + tb * 128 * 4              # labels (lane-padded)
                    + tb * tile_c * cos_bytes   # cos tile
                    + tb * 128 * 4)             # rowloss (lane-padded)

    while _vmem_est(tile_b) > (24 << 20) and tile_b > 8:
        tile_b = max(8, _round_up(tile_b // 2, 8))
    B_pad = _round_up(B, tile_b)
    n_bt = B_pad // tile_b

    # per-call input normalization (tiny: B x E), then MXU dtype
    xn = x / jnp.maximum(jnp.sqrt(jnp.sum(x * x, axis=1, keepdims=True)), eps)
    xn = xn.astype(w_prep.dtype)
    if B_pad != B:
        xn = jnp.pad(xn, ((0, B_pad - B), (0, 0)))

    w_in, m_in = w_prep, m_s
    if mask_padded:
        # TODO(synk): for production hoist this pad into prepare_weight /
        # prepare_margins so it is not repeated per forward call.
        w_in = jnp.pad(w_prep, ((0, 0), (0, C_pad - C)))
        m_in = jnp.pad(m_s, ((0, 0), (0, C_pad - C)))

    grid = (n_bt, C_pad // tile_c)
    vmem_limit = 48 * 1024 * 1024   # > v5e/v6e scoped defaults, < v7x 64 MiB physical

    if label is None:
        cost = pl.CostEstimate(
            flops=2 * B_pad * E * C_pad, transcendentals=0,
            bytes_accessed=(B_pad * E * 2 + n_bt * C_pad * E * 2
                            + B_pad * C_pad * 4))
        cos = pl.pallas_call(
            _cos_kernel,
            out_shape=jax.ShapeDtypeStruct((B_pad, C_pad), jnp.float32),
            grid_spec=pltpu.PrefetchScalarGridSpec(
                num_scalar_prefetch=0, grid=grid,
                in_specs=[pl.BlockSpec((tile_b, E), lambda bi, ci: (bi, 0)),
                          pl.BlockSpec((E, tile_c), lambda bi, ci: (0, ci))],
                out_specs=pl.BlockSpec((tile_b, tile_c), lambda bi, ci: (bi, ci))),
            compiler_params=pltpu.CompilerParams(
                dimension_semantics=("parallel", "parallel"),
                vmem_limit_bytes=vmem_limit),
            cost_estimate=cost,
        )(xn, w_in)
        if B_pad != B or C_pad != C:
            cos = cos[:B, :C]
        return (cos,)

    label_arr = jnp.asarray(label, dtype=jnp.int32)
    if B_pad != B:
        label_arr = jnp.zeros((B_pad,), jnp.int32).at[:B].set(label_arr)
    label2d = label_arr.reshape(B_pad, 1)
    bias1 = jnp.asarray(bias, dtype=jnp.float32).reshape(1)

    cost = pl.CostEstimate(
        flops=2 * B_pad * E * C_pad + 8 * B_pad * C_pad,
        transcendentals=2 * B_pad * C_pad,
        bytes_accessed=(B_pad * E * 2 + n_bt * C_pad * E * 2 + C_pad * 4
                        + B_pad * 4 + B_pad * C_pad * cos_bytes + B_pad * 4))

    kernel = functools.partial(
        _cos_loss_kernel, s=float(s), l=float(l), tile_c=tile_c,
        num_classes=C, emit_cos=return_cos, mask_padded=mask_padded)

    x_spec = pl.BlockSpec((tile_b, E), lambda bi, ci, bias: (bi, 0))
    w_spec = pl.BlockSpec((E, tile_c), lambda bi, ci, bias: (0, ci))
    m_spec = pl.BlockSpec((1, tile_c), lambda bi, ci, bias: (0, ci))
    lbl_spec = pl.BlockSpec((tile_b, 1), lambda bi, ci, bias: (bi, 0))
    row_spec = pl.BlockSpec((tile_b, 1), lambda bi, ci, bias: (bi, 0))
    cos_spec = pl.BlockSpec((tile_b, tile_c), lambda bi, ci, bias: (bi, ci))

    if return_cos:
        out_shape = (jax.ShapeDtypeStruct((B_pad, C_pad), cos_dtype),
                     jax.ShapeDtypeStruct((B_pad, 1), jnp.float32))
        out_specs = (cos_spec, row_spec)
    else:
        out_shape = jax.ShapeDtypeStruct((B_pad, 1), jnp.float32)
        out_specs = row_spec

    out = pl.pallas_call(
        kernel,
        out_shape=out_shape,
        grid_spec=pltpu.PrefetchScalarGridSpec(
            num_scalar_prefetch=1, grid=grid,
            in_specs=[x_spec, w_spec, m_spec, lbl_spec],
            out_specs=out_specs),
        compiler_params=pltpu.CompilerParams(
            dimension_semantics=("parallel", "arbitrary"),
            vmem_limit_bytes=vmem_limit),
        cost_estimate=cost,
    )(bias1, xn, w_in, m_in, label2d)

    if return_cos:
        cos, row_loss = out
        if B_pad != B or C_pad != C:
            cos = cos[:B, :C]
        total_loss = jnp.mean(row_loss[:B])
        return (cos, total_loss)
    row_loss = out
    total_loss = jnp.mean(row_loss[:B])
    return (total_loss,)


# ---------------------------------------------------------------------------
# Pure-JAX f32 reference (mirrors the PyTorch module)
# ---------------------------------------------------------------------------

def _reference(x, weight, m_l, bias, label, s, l, eps=1e-5):
    xn = x / jnp.maximum(jnp.linalg.norm(x, axis=1, keepdims=True), eps)
    wn = weight / jnp.maximum(jnp.linalg.norm(weight, axis=1, keepdims=True), eps)
    cos = xn @ wn.T
    C = weight.shape[0]
    one_hot = jnp.arange(C)[None, :] == label[:, None]
    pos = jnp.clip((cos - m_l.reshape(1, -1)) * s - bias, -s, s)
    neg = jnp.clip(cos * s - bias, -s, s)
    pos_loss = jnp.log1p(jnp.exp(-pos))
    neg_loss = jnp.log1p(jnp.exp(neg)) * l
    loss_mat = jnp.where(one_hot, pos_loss, neg_loss)
    return cos, loss_mat.sum(axis=1).mean()


if __name__ == "__main__":
    # small shapes consistent with the module (in_features default 128)
    B, E, C = 8, 128, 1024
    s, lambda_, a, b_margin, l, r = 64.0, 0.25, 0.5, 0.05, 1.0, 1.0

    key = jax.random.PRNGKey(0)
    kx, kw, kl = jax.random.split(key, 3)

    x = jax.random.normal(kx, (B, E), dtype=jnp.float32)
    # kaiming_normal_(a=1, mode='fan_in', leaky_relu): std = 1/sqrt(in_features)
    weight = jax.random.normal(kw, (C, E), dtype=jnp.float32) * (1.0 / math.sqrt(E))
    label = jax.random.randint(kl, (B,), 0, C, dtype=jnp.int32)
    class_counts = (jnp.arange(C) % 97) + 5           # deterministic counts in [5, 101]
    bias = jnp.float32(math.log(C * r * 10))          # constant_(bias, log(C*r*10))

    # hoisted prep: done once, refreshed only when the weight / counts change
    w_prep = prepare_weight(weight)
    m_s = prepare_margins(class_counts, a=a, lambda_=lambda_, b=b_margin, s=s)
    m_l = a * class_counts.astype(jnp.float32) ** (-lambda_) + b_margin

    cos, loss = dm_uce_forward(x, w_prep, m_s, bias, label, s=s, l=l)
    jax.block_until_ready((cos, loss))

    (cos_only,) = dm_uce_forward(x, w_prep, m_s, bias, None, s=s, l=l)
    cos_only = jax.block_until_ready(cos_only)

    # loss-only fast path (skips the B x C cos write entirely)
    (loss_only,) = dm_uce_forward(x, w_prep, m_s, bias, label, s=s, l=l,
                                  return_cos=False)
    loss_only = jax.block_until_ready(loss_only)

    ref_cos, ref_loss = _reference(x, weight, m_l, bias, label, s, l)

    assert cos.shape == (B, C) and cos_only.shape == (B, C)
    assert jnp.allclose(cos, ref_cos, atol=5e-3), "cos_theta mismatch"
    assert jnp.allclose(cos_only, ref_cos, atol=5e-3), "cos_theta (label=None) mismatch"
    assert jnp.allclose(loss, ref_loss, rtol=2e-2, atol=1e-2), "loss mismatch"
    assert jnp.allclose(loss_only, ref_loss, rtol=2e-2, atol=1e-2), "loss-only mismatch"

    # padding/masking path: non-multiple-of-128 classes, odd batch size
    B2, C2 = 7, 1000
    k2x, k2w, k2l = jax.random.split(jax.random.PRNGKey(1), 3)
    x2 = jax.random.normal(k2x, (B2, E), dtype=jnp.float32)
    weight2 = jax.random.normal(k2w, (C2, E), dtype=jnp.float32) * (1.0 / math.sqrt(E))
    label2 = jax.random.randint(k2l, (B2,), 0, C2, dtype=jnp.int32)
    counts2 = (jnp.arange(C2) % 53) + 3
    bias2 = jnp.float32(math.log(C2 * r * 10))
    w_prep2 = prepare_weight(weight2)
    m_s2 = prepare_margins(counts2, a=a, lambda_=lambda_, b=b_margin, s=s)
    m_l2 = a * counts2.astype(jnp.float32) ** (-lambda_) + b_margin

    cos2, loss2 = dm_uce_forward(x2, w_prep2, m_s2, bias2, label2, s=s, l=l)
    jax.block_until_ready((cos2, loss2))
    ref_cos2, ref_loss2 = _reference(x2, weight2, m_l2, bias2, label2, s, l)
    assert cos2.shape == (B2, C2)
    assert jnp.allclose(cos2, ref_cos2, atol=5e-3), "padded cos_theta mismatch"
    assert jnp.allclose(loss2, ref_loss2, rtol=2e-2, atol=1e-2), "padded loss mismatch"

    print("KERNEL_OK")
</pallas_src>

<mosaic_0001>
module attributes {stable_mosaic.version = 11 : i64} {
  func.func @_cos_loss_kernel(%arg0: i32, %arg1: i32, %arg2: memref<1xf32, #tpu.memory_space<smem>>, %arg3: memref<8x128xbf16, #tpu.memory_space<vmem>>, %arg4: memref<128x1024xbf16, #tpu.memory_space<vmem>>, %arg5: memref<1x1024xf32, #tpu.memory_space<vmem>>, %arg6: memref<8x1xi32, #tpu.memory_space<vmem>>, %arg7: memref<8x1024xf32, #tpu.memory_space<vmem>>, %arg8: memref<8x1xf32, #tpu.memory_space<vmem>>) attributes {dimension_semantics = [#tpu.dimension_semantics<parallel>, #tpu.dimension_semantics<arbitrary>], iteration_bounds = array<i64: 1, 1>, scalar_prefetch = 1 : i64, scratch_operands = 0 : i64, tpu.core_type = #tpu.core_type<tc>, window_params = [{transform_indices = @transform_0, window_bounds = array<i64: 8, 128>}, {transform_indices = @transform_1, window_bounds = array<i64: 128, 1024>}, {transform_indices = @transform_2, window_bounds = array<i64: 1, 1024>}, {transform_indices = @transform_3, window_bounds = array<i64: 8, 1>}, {transform_indices = @transform_4, window_bounds = array<i64: 8, 1024>}, {transform_indices = @transform_5, window_bounds = array<i64: 8, 1>}]} {
    %c0 = arith.constant 0 : index
    %0 = memref.load %arg2[%c0] : memref<1xf32, #tpu.memory_space<smem>>
    %c0_0 = arith.constant 0 : index
    %c0_1 = arith.constant 0 : index
    %1 = vector.load %arg3[%c0_0, %c0_1] : memref<8x128xbf16, #tpu.memory_space<vmem>>, vector<8x128xbf16>
    %c0_2 = arith.constant 0 : index
    %c0_3 = arith.constant 0 : index
    %2 = vector.load %arg4[%c0_2, %c0_3] : memref<128x1024xbf16, #tpu.memory_space<vmem>>, vector<128x1024xbf16>
    %cst = arith.constant dense<0.000000e+00> : vector<8x1024xf32>
    %3 = tpu.matmul %1, %2, %cst {dimension_numbers = #tpu.dot_dimension_numbers<[1], [0], [0], [1], [0, 0, 1, 1], [], []>} : vector<8x128xbf16>, vector<128x1024xbf16>, vector<8x1024xf32> -> vector<8x1024xf32>
    %c0_4 = arith.constant 0 : index
    %c0_5 = arith.constant 0 : index
    %4 = vector.load %arg7[%c0_4, %c0_5] : memref<8x1024xf32, #tpu.memory_space<vmem>>, vector<8x1024xf32>
    tpu.vector_store %arg7[%c0_4, %c0_5], %3 {strides = array<i32>} : memref<8x1024xf32, #tpu.memory_space<vmem>>, vector<8x1024xf32>,
    %c1024_i32 = arith.constant 1024 : i32
    %5 = arith.muli %arg1, %c1024_i32 : i32
    %6 = tpu.iota {dimensions = array<i32: 1>} : vector<8x1024xi32>
    %7 = vector.broadcast %5 : i32 to vector<8x1024xi32>
    %8 = arith.addi %7, %6 : vector<8x1024xi32>
    %c0_6 = arith.constant 0 : index
    %c0_7 = arith.constant 0 : index
    %9 = vector.load %arg6[%c0_6, %c0_7] : memref<8x1xi32, #tpu.memory_space<vmem>>, vector<8x1xi32>
    %10 = vector.broadcast %9 : vector<8x1xi32> to vector<8x1024xi32>
    %11 = arith.cmpi eq, %8, %10 : vector<8x1024xi32>
    %cst_8 = arith.constant 6.400000e+01 : f32
    %12 = vector.broadcast %cst_8 : f32 to vector<8x1024xf32>
    %13 = arith.mulf %3, %12 : vector<8x1024xf32>
    %14 = vector.broadcast %0 : f32 to vector<8x1024xf32>
    %15 = arith.subf %13, %14 : vector<8x1024xf32>
    %cst_9 = arith.constant -6.400000e+01 : f32
    %cst_10 = arith.constant 6.400000e+01 : f32
    %16 = vector.broadcast %cst_9 : f32 to vector<8x1024xf32>
    %17 = arith.maximumf %16, %15 : vector<8x1024xf32>
    %18 = vector.broadcast %cst_10 : f32 to vector<8x1024xf32>
    %19 = arith.minimumf %18, %17 : vector<8x1024xf32>
    %20 = math.exp %19 : vector<8x1024xf32>
    %cst_11 = arith.constant 1.000000e+00 : f32
    %21 = vector.broadcast %cst_11 : f32 to vector<8x1024xf32>
    %22 = arith.addf %21, %20 : vector<8x1024xf32>
    %23 = math.log %22 : vector<8x1024xf32>
    %cst_12 = arith.constant 1.000000e+00 : f32
    %24 = vector.broadcast %cst_12 : f32 to vector<8x1024xf32>
    %25 = arith.mulf %23, %24 : vector<8x1024xf32>
    %cst_13 = arith.constant dense<0.000000e+00> : vector<8xf32>
    %26 = vector.multi_reduction <add>, %25, %cst_13 [1] : vector<8x1024xf32> to vector<8xf32>
    %27 = vector.shape_cast %26 : vector<8xf32> to vector<8x1xf32>
    %cst_14 = arith.constant 0.000000e+00 : f32
    %28 = vector.broadcast %cst_14 : f32 to vector<8x1024xf32>
    %29 = arith.select %11, %15, %28 : vector<8x1024xi1>, vector<8x1024xf32>
    %cst_15 = arith.constant dense<0.000000e+00> : vector<8xf32>
    %30 = vector.multi_reduction <add>, %29, %cst_15 [1] : vector<8x1024xf32> to vector<8xf32>
    %31 = vector.shape_cast %30 : vector<8xf32> to vector<8x1xf32>
    %c0_16 = arith.constant 0 : index
    %c0_17 = arith.constant 0 : index
    %32 = vector.load %arg5[%c0_16, %c0_17] : memref<1x1024xf32, #tpu.memory_space<vmem>>, vector<1x1024xf32>
    %cst_18 = arith.constant 0.000000e+00 : f32
    %33 = vector.shape_cast %32 : vector<1x1024xf32> to vector<1x1024xf32>
    %34 = vector.broadcast %33 : vector<1x1024xf32> to vector<8x1024xf32>
    %35 = vector.broadcast %cst_18 : f32 to vector<8x1024xf32>
    %36 = arith.select %11, %34, %35 : vector<8x1024xi1>, vector<8x1024xf32>
    %cst_19 = arith.constant dense<0.000000e+00> : vector<8xf32>
    %37 = vector.multi_reduction <add>, %36, %cst_19 [1] : vector<8x1024xf32> to vector<8xf32>
    %38 = vector.shape_cast %37 : vector<8xf32> to vector<8x1xf32>
    %39 = arith.subf %31, %38 : vector<8x1xf32>
    %cst_20 = arith.constant -6.400000e+01 : f32
    %cst_21 = arith.constant 6.400000e+01 : f32
    %40 = vector.broadcast %cst_20 : f32 to vector<8x1xf32>
    %41 = arith.maximumf %40, %39 : vector<8x1xf32>
    %42 = vector.broadcast %cst_21 : f32 to vector<8x1xf32>
    %43 = arith.minimumf %42, %41 : vector<8x1xf32>
    %cst_22 = arith.constant 0.000000e+00 : f32
    %44 = vector.broadcast %cst_22 : f32 to vector<8x1xf32>
    %45 = arith.subf %44, %43 : vector<8x1xf32>
    %46 = math.exp %45 : vector<8x1xf32>
    %cst_23 = arith.constant 1.000000e+00 : f32
    %47 = vector.broadcast %cst_23 : f32 to vector<8x1xf32>
    %48 = arith.addf %47, %46 : vector<8x1xf32>
    %49 = math.log %48 : vector<8x1xf32>
    %cst_24 = arith.constant -6.400000e+01 : f32
    %cst_25 = arith.constant 6.400000e+01 : f32
    %50 = vector.broadcast %cst_24 : f32 to vector<8x1xf32>
    %51 = arith.maximumf %50, %31 : vector<8x1xf32>
    %52 = vector.broadcast %cst_25 : f32 to vector<8x1xf32>
    %53 = arith.minimumf %52, %51 : vector<8x1xf32>
    %54 = math.exp %53 : vector<8x1xf32>
    %cst_26 = arith.constant 1.000000e+00 : f32
    %55 = vector.broadcast %cst_26 : f32 to vector<8x1xf32>
    %56 = arith.addf %55, %54 : vector<8x1xf32>
    %57 = math.log %56 : vector<8x1xf32>
    %cst_27 = arith.constant 1.000000e+00 : f32
    %58 = vector.broadcast %cst_27 : f32 to vector<8x1xf32>
    %59 = arith.mulf %57, %58 : vector<8x1xf32>
    %c1024_i32_28 = arith.constant 1024 : i32
    %60 = arith.muli %arg1, %c1024_i32_28 : i32
    %61 = vector.broadcast %60 : i32 to vector<8x1xi32>
    %62 = arith.cmpi sge, %9, %61 : vector<8x1xi32>
    %c1_i32 = arith.constant 1 : i32
    %63 = arith.addi %arg1, %c1_i32 : i32
    %c1024_i32_29 = arith.constant 1024 : i32
    %64 = arith.muli %63, %c1024_i32_29 : i32
    %65 = vector.broadcast %64 : i32 to vector<8x1xi32>
    %66 = arith.cmpi slt, %9, %65 : vector<8x1xi32>
    %67 = arith.andi %62, %66 : vector<8x1xi1>
    %68 = arith.subf %49, %59 : vector<8x1xf32>
    %cst_30 = arith.constant 0.000000e+00 : f32
    %69 = vector.broadcast %cst_30 : f32 to vector<8x1xf32>
    %70 = arith.select %67, %68, %69 : vector<8x1xi1>, vector<8x1xf32>
    %c0_i32 = arith.constant 0 : i32
    %71 = arith.cmpi eq, %arg1, %c0_i32 : i32
    %72 = arith.extui %71 : i1 to i32
    %c0_i32_31 = arith.constant 0 : i32
    %73 = arith.cmpi ne, %72, %c0_i32_31 : i32
    scf.if %73 {
      %cst_36 = arith.constant 0.000000e+00 : f32
      %78 = vector.broadcast %cst_36 : f32 to vector<8x1xf32>
      %c0_37 = arith.constant 0 : index
      %c0_38 = arith.constant 0 : index
      %79 = vector.load %arg8[%c0_37, %c0_38] : memref<8x1xf32, #tpu.memory_space<vmem>>, vector<8x1xf32>
      tpu.vector_store %arg8[%c0_37, %c0_38], %78 {strides = array<i32>} : memref<8x1xf32, #tpu.memory_space<vmem>>, vector<8x1xf32>,
    } else {
    }
    %c0_32 = arith.constant 0 : index
    %c0_33 = arith.constant 0 : index
    %74 = vector.load %arg8[%c0_32, %c0_33] : memref<8x1xf32, #tpu.memory_space<vmem>>, vector<8x1xf32>
    %75 = arith.addf %27, %70 : vector<8x1xf32>
    %76 = arith.addf %74, %75 : vector<8x1xf32>
    %c0_34 = arith.constant 0 : index
    %c0_35 = arith.constant 0 : index
    %77 = vector.load %arg8[%c0_34, %c0_35] : memref<8x1xf32, #tpu.memory_space<vmem>>, vector<8x1xf32>
    tpu.vector_store %arg8[%c0_34, %c0_35], %76 {strides = array<i32>} : memref<8x1xf32, #tpu.memory_space<vmem>>, vector<8x1xf32>,
    return
  }
  func.func @transform_0(%arg0: i32, %arg1: i32, %arg2: memref<1xf32, #tpu.memory_space<smem>>) -> (i32, i32) {
    %c0_i32 = arith.constant 0 : i32
    %c0_i32_0 = arith.constant 0 : i32
    return %arg0, %c0_i32 : i32, i32
  }
  func.func @transform_1(%arg0: i32, %arg1: i32, %arg2: memref<1xf32, #tpu.memory_space<smem>>) -> (i32, i32) {
    %c0_i32 = arith.constant 0 : i32
    %c0_i32_0 = arith.constant 0 : i32
    return %c0_i32, %arg1 : i32, i32
  }
  func.func @transform_2(%arg0: i32, %arg1: i32, %arg2: memref<1xf32, #tpu.memory_space<smem>>) -> (i32, i32) {
    %c0_i32 = arith.constant 0 : i32
    %c0_i32_0 = arith.constant 0 : i32
    return %c0_i32, %arg1 : i32, i32
  }
  func.func @transform_3(%arg0: i32, %arg1: i32, %arg2: memref<1xf32, #tpu.memory_space<smem>>) -> (i32, i32) {
    %c0_i32 = arith.constant 0 : i32
    %c0_i32_0 = arith.constant 0 : i32
    return %arg0, %c0_i32 : i32, i32
  }
  func.func @transform_4(%arg0: i32, %arg1: i32, %arg2: memref<1xf32, #tpu.memory_space<smem>>) -> (i32, i32) {
    %c0_i32 = arith.constant 0 : i32
    return %arg0, %arg1 : i32, i32
  }
  func.func @transform_5(%arg0: i32, %arg1: i32, %arg2: memref<1xf32, #tpu.memory_space<smem>>) -> (i32, i32) {
    %c0_i32 = arith.constant 0 : i32
    %c0_i32_0 = arith.constant 0 : i32
    return %arg0, %c0_i32 : i32, i32
  }
}

</mosaic_0001>

<llo_original>
// kernel: tpu_custom_call.1
$region0: #{tpu_custom_call.1}
  #allocation0 [shape = 'u32[]', space=smem, size = 0x4, offset = 0x4, fixed_abs, tag = 'smem constant byte address 0x4 - core index']
  #allocation1 [shape = 'u32[144,128]{1,0:T(1,128)}', space=vmem, size = 0x12000, scoped, tag = 'internal scratch']
  #allocation2 [shape = 's32[1]{0}', space=sflag, size = 0x4, scoped, tag = 'scoped memory for tpu_custom_call.1']
  #allocation3 [shape = 'f32[1]{0:T(128)S(6)}', space=smem, size = 0x200, scoped, tag = 'prefetched SMEM operand 0']
  %s0 = inlined_call_operand.<no memory space> [shape: f32[1], index: 0, kind: input, shape index: {}]
  %s1 = inlined_call_operand.vmem [shape: bf16[8,128], index: 1, kind: input, shape index: {}]
  %s2 = inlined_call_operand.hbm [shape: bf16[128,1024], index: 2, kind: input, shape index: {}]
  %s3 = inlined_call_operand.vmem [shape: f32[1,1024], index: 3, kind: input, shape index: {}]
  %s4 = inlined_call_operand.vmem [shape: s32[8,1], index: 4, kind: input, shape index: {}]
  %s5 = inlined_call_operand.hbm [shape: f32[8,1024], index: 5, kind: output, shape index: {0}]
  %s6 = inlined_call_operand.vmem [shape: f32[8,1], index: 6, kind: output, shape index: {1}]
  %7 = xla_tuple %s5, %s6
  %s8 = sld [smem:[#allocation0]]
  $region42: #{tpu_custom_call.1} parent=0
    _
  %s10 = ssub.s32 1, %s8
  %s11 = scalar_select 0, %s10, %s8
  %12 = sst [smem:[#allocation3]] %s0
  $region1: #{tpu_custom_call.1} parent=0
    #allocation4 [shape = 'u8[262144]{0}', space=vmem, size = 0x40000, scoped, tag = 'input window, operand 2, single buffered']
    #allocation5 [shape = 's32[1]{0}', space=sflag, size = 0x4, scoped, tag = 'scoped memory for tpu_custom_call.1']
    #allocation6 [shape = 's32[1]{0}', space=sflag, size = 0x4, scoped, tag = 'scoped memory for tpu_custom_call.1']
    #allocation7 [shape = 'u8[32768]{0}', space=vmem, size = 0x8000, scoped, tag = 'output window, operand 0, single buffered']
    %13 = vsyncpa [#allocation5], 0
    %14 = vsyncpa [#allocation6], 0
    // Predicated region
    $region2: #{tpu_custom_call.1} parent=1 // pred_check
      _
    $region3: #{tpu_custom_call.1} parent=1 // pred_check_branch
      %16 = sbr.rel (0) target = $region5
    $region4: #{tpu_custom_call.1} parent=1 // pred_region
      _
    $region5: #{tpu_custom_call.1} parent=1 // pred_fallthru
      _
    // Predicated region
    $region6: #{tpu_custom_call.1} parent=1 // pred_check
      _
    $region7: #{tpu_custom_call.1} parent=1 // pred_check_branch
      %18 = sbr.rel (0) target = $region9
    $region8: #{tpu_custom_call.1} parent=1 // pred_region
      %s20 = ssub.s32 8192, 8192
      %21 = vsyncadd [#allocation5], %s20
      %s22 = sshll.u32 [#allocation4], 4
      %s23 = int_to_ptr.vmem [resolvable:$true] %s22
      %28 = dma.hbm_to_vmem [thread:$0]  %s2, 8192, %s23, [#allocation5], 512, 512, 32
    $region9: #{tpu_custom_call.1} parent=1 // pred_fallthru
      _
    // Predicated region
    $region10: #{tpu_custom_call.1} parent=1 // pred_check
      _
    $region11: #{tpu_custom_call.1} parent=1 // pred_check_branch
      %30 = sbr.rel (0) target = $region13
    $region12: #{tpu_custom_call.1} parent=1 // pred_region
      _
    $region13: #{tpu_custom_call.1} parent=1 // pred_fallthru
      _
    // Predicated region
    $region14: #{tpu_custom_call.1} parent=1 // pred_check
      _
    $region15: #{tpu_custom_call.1} parent=1 // pred_check_branch
      %32 = sbr.rel (0) target = $region17
    $region16: #{tpu_custom_call.1} parent=1 // pred_region
      _
    $region17: #{tpu_custom_call.1} parent=1 // pred_fallthru
      _
    // Predicated region
    $region18: #{tpu_custom_call.1} parent=1 // pred_check
      _
    $region19: #{tpu_custom_call.1} parent=1 // pred_check_branch
      %34 = sbr.rel (0) target = $region21
    $region20: #{tpu_custom_call.1} parent=1 // pred_region
      %35 = dma.done [#allocation5], 8192
    $region21: #{tpu_custom_call.1} parent=1 // pred_fallthru
      _
    %s37 = sld [smem:[#allocation3]]
    %v38 = vld [vmem:[%s1] sm:$0xf]
    %v39 = vld [vmem:[#allocation4] sm:$0xff]
    %v40 = vld [vmem:[#allocation4 + $0x8] sm:$0xff]
    %v41 = vld [vmem:[#allocation4 + $0x10] sm:$0xff]
    %v42 = vld [vmem:[#allocation4 + $0x18] sm:$0xff]
    %v43 = vld [vmem:[#allocation4 + $0x20] sm:$0xff]
    %v44 = vld [vmem:[#allocation4 + $0x28] sm:$0xff]
    %v45 = vld [vmem:[#allocation4 + $0x30] sm:$0xff]
    %v46 = vld [vmem:[#allocation4 + $0x38] sm:$0xff]
    %v47 = vld [vmem:[#allocation4 + $0x40] sm:$0xff]
    %v48 = vld [vmem:[#allocation4 + $0x48] sm:$0xff]
    %v49 = vld [vmem:[#allocation4 + $0x50] sm:$0xff]
    %v50 = vld [vmem:[#allocation4 + $0x58] sm:$0xff]
    %v51 = vld [vmem:[#allocation4 + $0x60] sm:$0xff]
    %v52 = vld [vmem:[#allocation4 + $0x68] sm:$0xff]
    %v53 = vld [vmem:[#allocation4 + $0x70] sm:$0xff]
    %v54 = vld [vmem:[#allocation4 + $0x78] sm:$0xff]
    %v55 = vld [vmem:[#allocation4 + $0x80] sm:$0xff]
    %v56 = vld [vmem:[#allocation4 + $0x88] sm:$0xff]
    %v57 = vld [vmem:[#allocation4 + $0x90] sm:$0xff]
    %v58 = vld [vmem:[#allocation4 + $0x98] sm:$0xff]
    %v59 = vld [vmem:[#allocation4 + $0xa0] sm:$0xff]
    %v60 = vld [vmem:[#allocation4 + $0xa8] sm:$0xff]
    %v61 = vld [vmem:[#allocation4 + $0xb0] sm:$0xff]
    %v62 = vld [vmem:[#allocation4 + $0xb8] sm:$0xff]
    %v63 = vld [vmem:[#allocation4 + $0xc0] sm:$0xff]
    %v64 = vld [vmem:[#allocation4 + $0xc8] sm:$0xff]
    %v65 = vld [vmem:[#allocation4 + $0xd0] sm:$0xff]
    %v66 = vld [vmem:[#allocation4 + $0xd8] sm:$0xff]
    %v67 = vld [vmem:[#allocation4 + $0xe0] sm:$0xff]
    %v68 = vld [vmem:[#allocation4 + $0xe8] sm:$0xff]
    %v69 = vld [vmem:[#allocation4 + $0xf0] sm:$0xff]
    %v70 = vld [vmem:[#allocation4 + $0xf8] sm:$0xff]
    %v71 = vld [vmem:[#allocation4 + $0x100] sm:$0xff]
    %v72 = vld [vmem:[#allocation4 + $0x108] sm:$0xff]
    %v73 = vld [vmem:[#allocation4 + $0x110] sm:$0xff]
    %v74 = vld [vmem:[#allocation4 + $0x118] sm:$0xff]
    %v75 = vld [vmem:[#allocation4 + $0x120] sm:$0xff]
    %v76 = vld [vmem:[#allocation4 + $0x128] sm:$0xff]
    %v77 = vld [vmem:[#allocation4 + $0x130] sm:$0xff]
    %v78 = vld [vmem:[#allocation4 + $0x138] sm:$0xff]
    %v79 = vld [vmem:[#allocation4 + $0x140] sm:$0xff]
    %v80 = vld [vmem:[#allocation4 + $0x148] sm:$0xff]
    %v81 = vld [vmem:[#allocation4 + $0x150] sm:$0xff]
    %v82 = vld [vmem:[#allocation4 + $0x158] sm:$0xff]
    %v83 = vld [vmem:[#allocation4 + $0x160] sm:$0xff]
    %v84 = vld [vmem:[#allocation4 + $0x168] sm:$0xff]
    %v85 = vld [vmem:[#allocation4 + $0x170] sm:$0xff]
    %v86 = vld [vmem:[#allocation4 + $0x178] sm:$0xff]
    %v87 = vld [vmem:[#allocation4 + $0x180] sm:$0xff]
    %v88 = vld [vmem:[#allocation4 + $0x188] sm:$0xff]
    %v89 = vld [vmem:[#allocation4 + $0x190] sm:$0xff]
    %v90 = vld [vmem:[#allocation4 + $0x198] sm:$0xff]
    %v91 = vld [vmem:[#allocation4 + $0x1a0] sm:$0xff]
    %v92 = vld [vmem:[#allocation4 + $0x1a8] sm:$0xff]
    %v93 = vld [vmem:[#allocation4 + $0x1b0] sm:$0xff]
    %v94 = vld [vmem:[#allocation4 + $0x1b8] sm:$0xff]
    %v95 = vld [vmem:[#allocation4 + $0x1c0] sm:$0xff]
    %v96 = vld [vmem:[#allocation4 + $0x1c8] sm:$0xff]
    %v97 = vld [vmem:[#allocation4 + $0x1d0] sm:$0xff]
    %v98 = vld [vmem:[#allocation4 + $0x1d8] sm:$0xff]
    %v99 = vld [vmem:[#allocation4 + $0x1e0] sm:$0xff]
    %v100 = vld [vmem:[#allocation4 + $0x1e8] sm:$0xff]
    %v101 = vld [vmem:[#allocation4 + $0x1f0] sm:$0xff]
    %v102 = vld [vmem:[#allocation4 + $0x1f8] sm:$0xff]
    %v167 = vunpack.c.l.b16 %v39
    %v168 = vunpack.c.h.b16 %v39
    %v169 = vunpack.c.l.b16 %v40
    %v170 = vunpack.c.h.b16 %v40
    %v171 = vunpack.c.l.b16 %v41
    %v172 = vunpack.c.h.b16 %v41
    %v173 = vunpack.c.l.b16 %v42
    %v174 = vunpack.c.h.b16 %v42
    %v175 = vunpack.c.l.b16 %v43
    %v176 = vunpack.c.h.b16 %v43
    %v177 = vunpack.c.l.b16 %v44
    %v178 = vunpack.c.h.b16 %v44
    %v179 = vunpack.c.l.b16 %v45
    %v180 = vunpack.c.h.b16 %v45
    %v181 = vunpack.c.l.b16 %v46
    %v182 = vunpack.c.h.b16 %v46
    %v183 = vunpack.c.l.b16 %v47
    %v184 = vunpack.c.h.b16 %v47
    %v185 = vunpack.c.l.b16 %v48
    %v186 = vunpack.c.h.b16 %v48
    %v187 = vunpack.c.l.b16 %v49
    %v188 = vunpack.c.h.b16 %v49
    %v189 = vunpack.c.l.b16 %v50
    %v190 = vunpack.c.h.b16 %v50
    %v191 = vunpack.c.l.b16 %v51
    %v192 = vunpack.c.h.b16 %v51
    %v193 = vunpack.c.l.b16 %v52
    %v194 = vunpack.c.h.b16 %v52
    %v195 = vunpack.c.l.b16 %v53
    %v196 = vunpack.c.h.b16 %v53
    %v197 = vunpack.c.l.b16 %v54
    %v198 = vunpack.c.h.b16 %v54
    %v199 = vunpack.c.l.b16 %v55
    %v200 = vunpack.c.h.b16 %v55
    %v201 = vunpack.c.l.b16 %v56
    %v202 = vunpack.c.h.b16 %v56
    %v203 = vunpack.c.l.b16 %v57
    %v204 = vunpack.c.h.b16 %v57
    %v205 = vunpack.c.l.b16 %v58
    %v206 = vunpack.c.h.b16 %v58
    %v207 = vunpack.c.l.b16 %v59
    %v208 = vunpack.c.h.b16 %v59
    %v209 = vunpack.c.l.b16 %v60
    %v210 = vunpack.c.h.b16 %v60
    %v211 = vunpack.c.l.b16 %v61
    %v212 = vunpack.c.h.b16 %v61
    %v213 = vunpack.c.l.b16 %v62
    %v214 = vunpack.c.h.b16 %v62
    %v215 = vunpack.c.l.b16 %v63
    %v216 = vunpack.c.h.b16 %v63
    %v217 = vunpack.c.l.b16 %v64
    %v218 = vunpack.c.h.b16 %v64
    %v219 = vunpack.c.l.b16 %v65
    %v220 = vunpack.c.h.b16 %v65
    %v221 = vunpack.c.l.b16 %v66
    %v222 = vunpack.c.h.b16 %v66
    %v223 = vunpack.c.l.b16 %v67
    %v224 = vunpack.c.h.b16 %v67
    %v225 = vunpack.c.l.b16 %v68
    %v226 = vunpack.c.h.b16 %v68
    %v227 = vunpack.c.l.b16 %v69
    %v228 = vunpack.c.h.b16 %v69
    %v229 = vunpack.c.l.b16 %v70
    %v230 = vunpack.c.h.b16 %v70
    %v231 = vunpack.c.l.b16 %v71
    %v232 = vunpack.c.h.b16 %v71
    %v233 = vunpack.c.l.b16 %v72
    %v234 = vunpack.c.h.b16 %v72
    %v235 = vunpack.c.l.b16 %v73
    %v236 = vunpack.c.h.b16 %v73
    %v237 = vunpack.c.l.b16 %v74
    %v238 = vunpack.c.h.b16 %v74
    %v239 = vunpack.c.l.b16 %v75
    %v240 = vunpack.c.h.b16 %v75
    %v241 = vunpack.c.l.b16 %v76
    %v242 = vunpack.c.h.b16 %v76
    %v243 = vunpack.c.l.b16 %v77
    %v244 = vunpack.c.h.b16 %v77
    %v245 = vunpack.c.l.b16 %v78
    %v246 = vunpack.c.h.b16 %v78
    %v247 = vunpack.c.l.b16 %v79
    %v248 = vunpack.c.h.b16 %v79
    %v249 = vunpack.c.l.b16 %v80
    %v250 = vunpack.c.h.b16 %v80
    %v251 = vunpack.c.l.b16 %v81
    %v252 = vunpack.c.h.b16 %v81
    %v253 = vunpack.c.l.b16 %v82
    %v254 = vunpack.c.h.b16 %v82
    %v255 = vunpack.c.l.b16 %v83
    %v256 = vunpack.c.h.b16 %v83
    %v257 = vunpack.c.l.b16 %v84
    %v258 = vunpack.c.h.b16 %v84
    %v259 = vunpack.c.l.b16 %v85
    %v260 = vunpack.c.h.b16 %v85
    %v261 = vunpack.c.l.b16 %v86
    %v262 = vunpack.c.h.b16 %v86
    %v263 = vunpack.c.l.b16 %v87
    %v264 = vunpack.c.h.b16 %v87
    %v265 = vunpack.c.l.b16 %v88
    %v266 = vunpack.c.h.b16 %v88
    %v267 = vunpack.c.l.b16 %v89
    %v268 = vunpack.c.h.b16 %v89
    %v269 = vunpack.c.l.b16 %v90
    %v270 = vunpack.c.h.b16 %v90
    %v271 = vunpack.c.l.b16 %v91
    %v272 = vunpack.c.h.b16 %v91
    %v273 = vunpack.c.l.b16 %v92
    %v274 = vunpack.c.h.b16 %v92
    %v275 = vunpack.c.l.b16 %v93
    %v276 = vunpack.c.h.b16 %v93
    %v277 = vunpack.c.l.b16 %v94
    %v278 = vunpack.c.h.b16 %v94
    %v279 = vunpack.c.l.b16 %v95
    %v280 = vunpack.c.h.b16 %v95
    %v281 = vunpack.c.l.b16 %v96
    %v282 = vunpack.c.h.b16 %v96
    %v283 = vunpack.c.l.b16 %v97
    %v284 = vunpack.c.h.b16 %v97
    %v285 = vunpack.c.l.b16 %v98
    %v286 = vunpack.c.h.b16 %v98
    %v287 = vunpack.c.l.b16 %v99
    %v288 = vunpack.c.h.b16 %v99
    %v289 = vunpack.c.l.b16 %v100
    %v290 = vunpack.c.h.b16 %v100
    %v291 = vunpack.c.l.b16 %v101
    %v292 = vunpack.c.h.b16 %v101
    %v293 = vunpack.c.l.b16 %v102
    %v294 = vunpack.c.h.b16 %v102
    %v295 = vpack.c.b16 %v175, %v167
    %v296 = vpack.c.b16 %v176, %v168
    %v297 = vpack.c.b16 %v177, %v169
    %v298 = vpack.c.b16 %v178, %v170
    %v299 = vpack.c.b16 %v179, %v171
    %v300 = vpack.c.b16 %v180, %v172
    %v301 = vpack.c.b16 %v181, %v173
    %v302 = vpack.c.b16 %v182, %v174
    %v303 = vpack.c.b16 %v191, %v183
    %v304 = vpack.c.b16 %v192, %v184
    %v305 = vpack.c.b16 %v193, %v185
    %v306 = vpack.c.b16 %v194, %v186
    %v307 = vpack.c.b16 %v195, %v187
    %v308 = vpack.c.b16 %v196, %v188
    %v309 = vpack.c.b16 %v197, %v189
    %v310 = vpack.c.b16 %v198, %v190
    %v311 = vpack.c.b16 %v207, %v199
    %v312 = vpack.c.b16 %v208, %v200
    %v313 = vpack.c.b16 %v209, %v201
    %v314 = vpack.c.b16 %v210, %v202
    %v315 = vpack.c.b16 %v211, %v203
    %v316 = vpack.c.b16 %v212, %v204
    %v317 = vpack.c.b16 %v213, %v205
    %v318 = vpack.c.b16 %v214, %v206
    %v319 = vpack.c.b16 %v223, %v215
    %v320 = vpack.c.b16 %v224, %v216
    %v321 = vpack.c.b16 %v225, %v217
    %v322 = vpack.c.b16 %v226, %v218
    %v323 = vpack.c.b16 %v227, %v219
    %v324 = vpack.c.b16 %v228, %v220
    %v325 = vpack.c.b16 %v229, %v221
    %v326 = vpack.c.b16 %v230, %v222
    %v327 = vpack.c.b16 %v239, %v231
    %v328 = vpack.c.b16 %v240, %v232
    %v329 = vpack.c.b16 %v241, %v233
    %v330 = vpack.c.b16 %v242, %v234
    %v331 = vpack.c.b16 %v243, %v235
    %v332 = vpack.c.b16 %v244, %v236
    %v333 = vpack.c.b16 %v245, %v237
    %v334 = vpack.c.b16 %v246, %v238
    %v335 = vpack.c.b16 %v255, %v247
    %v336 = vpack.c.b16 %v256, %v248
    %v337 = vpack.c.b16 %v257, %v249
    %v338 = vpack.c.b16 %v258, %v250
    %v339 = vpack.c.b16 %v259, %v251
    %v340 = vpack.c.b16 %v260, %v252
    %v341 = vpack.c.b16 %v261, %v253
    %v342 = vpack.c.b16 %v262, %v254
    %v343 = vpack.c.b16 %v271, %v263
    %v344 = vpack.c.b16 %v272, %v264
    %v345 = vpack.c.b16 %v273, %v265
    %v346 = vpack.c.b16 %v274, %v266
    %v347 = vpack.c.b16 %v275, %v267
    %v348 = vpack.c.b16 %v276, %v268
    %v349 = vpack.c.b16 %v277, %v269
    %v350 = vpack.c.b16 %v278, %v270
    %v351 = vpack.c.b16 %v287, %v279
    %v352 = vpack.c.b16 %v288, %v280
    %v353 = vpack.c.b16 %v289, %v281
    %v354 = vpack.c.b16 %v290, %v282
    %v355 = vpack.c.b16 %v291, %v283
    %v356 = vpack.c.b16 %v292, %v284
    %v357 = vpack.c.b16 %v293, %v285
    %v358 = vpack.c.b16 %v294, %v286
    %423 = vmatprep.subr.bf16.mxu0 %v296
    %424 = vmatpush1.bf16.msra.mxu0 %v295
    %425 = vmatprep.subr.bf16.mxu0 %v304
    %426 = vmatpush1.bf16.msra.mxu0 %v303
    %427 = vmatprep.subr.bf16.mxu0 %v312
    %428 = vmatpush1.bf16.msra.mxu0 %v311
    %429 = vmatprep.subr.bf16.mxu0 %v320
    %430 = vmatpush1.bf16.msra.mxu0 %v319
    %431 = vmatprep.subr.bf16.mxu0 %v328
    %432 = vmatpush1.bf16.msra.mxu0 %v327
    %433 = vmatprep.subr.bf16.mxu0 %v336
    %434 = vmatpush1.bf16.msra.mxu0 %v335
    %435 = vmatprep.subr.bf16.mxu0 %v344
    %436 = vmatpush1.bf16.msra.mxu0 %v343
    %437 = vmatprep.subr.bf16.mxu0 %v352
    %438 = vmatpush1.bf16.msra.mxu0 %v351
    %439 = vmatprep.subr.bf16.mxu0 0
    %440 = vmatpush1.bf16.msra.mxu0 0
    %441 = vmatprep.subr.bf16.mxu0 0
    %442 = vmatpush1.bf16.msra.mxu0 0
    %443 = vmatprep.subr.bf16.mxu0 0
    %444 = vmatpush1.bf16.msra.mxu0 0
    %445 = vmatprep.subr.bf16.mxu0 0
    %446 = vmatpush1.bf16.msra.mxu0 0
    %447 = vmatprep.subr.bf16.mxu0 0
    %448 = vmatpush1.bf16.msra.mxu0 0
    %449 = vmatprep.subr.bf16.mxu0 0
    %450 = vmatpush1.bf16.msra.mxu0 0
    %451 = vmatprep.subr.bf16.mxu0 0
    %452 = vmatpush1.bf16.msra.mxu0 0
    %453 = vmatprep.subr.bf16.mxu0 0
    %454 = vmatpush1.bf16.msra.mxu0 0
    %455 = vmatprep.mubr.bf16.mxu0 0
    %456 = vmatmul.mubr.bf16.gmra.mrb[0].mxu0 %v38
    %v457 = vpop.f32.mrb[0].mxu0
    %v458 = vadd.f32 0.0, %v457
    %v459 = vpop.f32.mrb[0].mxu0
    %v460 = vadd.f32 0.0, %v459
    %v461 = vpop.f32.mrb[0].mxu0
    %v462 = vpop.f32.mrb[0].mxu0
    %463 = vdwg.mxu0
    %464 = vmatprep.subr.bf16.mxu0 %v298
    %465 = vmatpush1.bf16.msra.mxu0 %v297
    %466 = vmatprep.subr.bf16.mxu0 %v306
    %467 = vmatpush1.bf16.msra.mxu0 %v305
    %468 = vmatprep.subr.bf16.mxu0 %v314
    %469 = vmatpush1.bf16.msra.mxu0 %v313
    %470 = vmatprep.subr.bf16.mxu0 %v322
    %471 = vmatpush1.bf16.msra.mxu0 %v321
    %472 = vmatprep.subr.bf16.mxu0 %v330
    %473 = vmatpush1.bf16.msra.mxu0 %v329
    %474 = vmatprep.subr.bf16.mxu0 %v338
    %475 = vmatpush1.bf16.msra.mxu0 %v337
    %476 = vmatprep.subr.bf16.mxu0 %v346
    %477 = vmatpush1.bf16.msra.mxu0 %v345
    %478 = vmatprep.subr.bf16.mxu0 %v354
    %479 = vmatpush1.bf16.msra.mxu0 %v353
    %480 = vmatprep.subr.bf16.mxu0 0
    %481 = vmatpush1.bf16.msra.mxu0 0
    %482 = vmatprep.subr.bf16.mxu0 0
    %483 = vmatpush1.bf16.msra.mxu0 0
    %484 = vmatprep.subr.bf16.mxu0 0
    %485 = vmatpush1.bf16.msra.mxu0 0
    %486 = vmatprep.subr.bf16.mxu0 0
    %487 = vmatpush1.bf16.msra.mxu0 0
    %488 = vmatprep.subr.bf16.mxu0 0
    %489 = vmatpush1.bf16.msra.mxu0 0
    %490 = vmatprep.subr.bf16.mxu0 0
    %491 = vmatpush1.bf16.msra.mxu0 0
    %492 = vmatprep.subr.bf16.mxu0 0
    %493 = vmatpush1.bf16.msra.mxu0 0
    %494 = vmatprep.subr.bf16.mxu0 0
    %495 = vmatpush1.bf16.msra.mxu0 0
    %496 = vmatprep.mubr.bf16.mxu0 0
    %497 = vmatmul.mubr.bf16.gmra.mrb[0].mxu0 %v38
    %v498 = vpop.f32.mrb[0].mxu0
    %v499 = vadd.f32 0.0, %v498
    %v500 = vpop.f32.mrb[0].mxu0
    %v501 = vadd.f32 0.0, %v500
    %v502 = vpop.f32.mrb[0].mxu0
    %v503 = vpop.f32.mrb[0].mxu0
    %504 = vdwg.mxu0
    %505 = vmatprep.subr.bf16.mxu0 %v300
    %506 = vmatpush1.bf16.msra.mxu0 %v299
    %507 = vmatprep.subr.bf16.mxu0 %v308
    %508 = vmatpush1.bf16.msra.mxu0 %v307
    %509 = vmatprep.subr.bf16.mxu0 %v316
    %510 = vmatpush1.bf16.msra.mxu0 %v315
    %511 = vmatprep.subr.bf16.mxu0 %v324
    %512 = vmatpush1.bf16.msra.mxu0 %v323
    %513 = vmatprep.subr.bf16.mxu0 %v332
    %514 = vmatpush1.bf16.msra.mxu0 %v331
    %515 = vmatprep.subr.bf16.mxu0 %v340
    %516 = vmatpush1.bf16.msra.mxu0 %v339
    %517 = vmatprep.subr.bf16.mxu0 %v348
    %518 = vmatpush1.bf16.msra.mxu0 %v347
    %519 = vmatprep.subr.bf16.mxu0 %v356
    %520 = vmatpush1.bf16.msra.mxu0 %v355
    %521 = vmatprep.subr.bf16.mxu0 0
    %522 = vmatpush1.bf16.msra.mxu0 0
    %523 = vmatprep.subr.bf16.mxu0 0
    %524 = vmatpush1.bf16.msra.mxu0 0
    %525 = vmatprep.subr.bf16.mxu0 0
    %526 = vmatpush1.bf16.msra.mxu0 0
    %527 = vmatprep.subr.bf16.mxu0 0
    %528 = vmatpush1.bf16.msra.mxu0 0
    %529 = vmatprep.subr.bf16.mxu0 0
    %530 = vmatpush1.bf16.msra.mxu0 0
    %531 = vmatprep.subr.bf16.mxu0 0
    %532 = vmatpush1.bf16.msra.mxu0 0
    %533 = vmatprep.subr.bf16.mxu0 0
    %534 = vmatpush1.bf16.msra.mxu0 0
    %535 = vmatprep.subr.bf16.mxu0 0
    %536 = vmatpush1.bf16.msra.mxu0 0
    %537 = vmatprep.mubr.bf16.mxu0 0
    %538 = vmatmul.mubr.bf16.gmra.mrb[0].mxu0 %v38
    %v539 = vpop.f32.mrb[0].mxu0
    %v540 = vadd.f32 0.0, %v539
    %v541 = vpop.f32.mrb[0].mxu0
    %v542 = vadd.f32 0.0, %v541
    %v543 = vpop.f32.mrb[0].mxu0
    %v544 = vpop.f32.mrb[0].mxu0
    %545 = vdwg.mxu0
    %546 = vmatprep.subr.bf16.mxu0 %v302
    %547 = vmatpush1.bf16.msra.mxu0 %v301
    %548 = vmatprep.subr.bf16.mxu0 %v310
    %549 = vmatpush1.bf16.msra.mxu0 %v309
    %550 = vmatprep.subr.bf16.mxu0 %v318
    %551 = vmatpush1.bf16.msra.mxu0 %v317
    %552 = vmatprep.subr.bf16.mxu0 %v326
    %553 = vmatpush1.bf16.msra.mxu0 %v325
    %554 = vmatprep.subr.bf16.mxu0 %v334
    %555 = vmatpush1.bf16.msra.mxu0 %v333
    %556 = vmatprep.subr.bf16.mxu0 %v342
    %557 = vmatpush1.bf16.msra.mxu0 %v341
    %558 = vmatprep.subr.bf16.mxu0 %v350
    %559 = vmatpush1.bf16.msra.mxu0 %v349
    %560 = vmatprep.subr.bf16.mxu0 %v358
    %561 = vmatpush1.bf16.msra.mxu0 %v357
    %562 = vmatprep.subr.bf16.mxu0 0
    %563 = vmatpush1.bf16.msra.mxu0 0
    %564 = vmatprep.subr.bf16.mxu0 0
    %565 = vmatpush1.bf16.msra.mxu0 0
    %566 = vmatprep.subr.bf16.mxu0 0
    %567 = vmatpush1.bf16.msra.mxu0 0
    %568 = vmatprep.subr.bf16.mxu0 0
    %569 = vmatpush1.bf16.msra.mxu0 0
    %570 = vmatprep.subr.bf16.mxu0 0
    %571 = vmatpush1.bf16.msra.mxu0 0
    %572 = vmatprep.subr.bf16.mxu0 0
    %573 = vmatpush1.bf16.msra.mxu0 0
    %574 = vmatprep.subr.bf16.mxu0 0
    %575 = vmatpush1.bf16.msra.mxu0 0
    %576 = vmatprep.subr.bf16.mxu0 0
    %577 = vmatpush1.bf16.msra.mxu0 0
    %578 = vmatprep.mubr.bf16.mxu0 0
    %579 = vmatmul.mubr.bf16.gmra.mrb[0].mxu0 %v38
    %v580 = vpop.f32.mrb[0].mxu0
    %v581 = vadd.f32 0.0, %v580
    %v582 = vpop.f32.mrb[0].mxu0
    %v583 = vadd.f32 0.0, %v582
    %v584 = vpop.f32.mrb[0].mxu0
    %v585 = vpop.f32.mrb[0].mxu0
    %586 = vdwg.mxu0
    %587 = vst [vmem:[#allocation7] sm:$0xff] %v458
    %588 = vst [vmem:[#allocation7 + $0x8] sm:$0xff] %v460
    %589 = vst [vmem:[#allocation7 + $0x10] sm:$0xff] %v499
    %590 = vst [vmem:[#allocation7 + $0x18] sm:$0xff] %v501
    %591 = vst [vmem:[#allocation7 + $0x20] sm:$0xff] %v540
    %592 = vst [vmem:[#allocation7 + $0x28] sm:$0xff] %v542
    %593 = vst [vmem:[#allocation7 + $0x30] sm:$0xff] %v581
    %594 = vst [vmem:[#allocation7 + $0x38] sm:$0xff] %v583
    %s595 = smul.u32 0, 1024
    %v596 = vlaneseq
    %v597 = vand.u32 %v596, 127
    %v598 = vadd.s32 %v597, 128
    %v599 = vadd.s32 %v597, 256
    %v600 = vadd.s32 %v597, 384
    %v601 = vadd.s32 %v597, 512
    %v602 = vadd.s32 %v597, 640
    %v603 = vadd.s32 %v597, 768
    %v604 = vadd.s32 %v597, 896
    %v605 = vstv %s595
    %v606 = vadd.s32 %v605, %v597
    %v607 = vadd.s32 %v605, %v598
    %v608 = vadd.s32 %v605, %v599
    %v609 = vadd.s32 %v605, %v600
    %v610 = vadd.s32 %v605, %v601
    %v611 = vadd.s32 %v605, %v602
    %v612 = vadd.s32 %v605, %v603
    %v613 = vadd.s32 %v605, %v604
    %v614 = vld [vmem:[%s4] sm:$0xff]
    %615 = vset.pattern.permute.xlu0 0
    %616 = vperm.xlu0 %615, %v614
    %v617 = vpop.permute.xlu0 %616
    %vm618 = vcmp.eq.s32.totalorder %v606, %v617
    %vm619 = vcmp.eq.s32.totalorder %v607, %v617
    %vm620 = vcmp.eq.s32.totalorder %v608, %v617
    %vm621 = vcmp.eq.s32.totalorder %v609, %v617
    %vm622 = vcmp.eq.s32.totalorder %v610, %v617
    %vm623 = vcmp.eq.s32.totalorder %v611, %v617
    %vm624 = vcmp.eq.s32.totalorder %v612, %v617
    %vm625 = vcmp.eq.s32.totalorder %v613, %v617
    %v626 = vmul.f32 %v458, 64.0
    %v627 = vmul.f32 %v460, 64.0
    %v628 = vmul.f32 %v499, 64.0
    %v629 = vmul.f32 %v501, 64.0
    %v630 = vmul.f32 %v540, 64.0
    %v631 = vmul.f32 %v542, 64.0
    %v632 = vmul.f32 %v581, 64.0
    %v633 = vmul.f32 %v583, 64.0
    %v634 = vstv %s37
    %v635 = vsub.f32 %v626, %v634
    %v636 = vsub.f32 %v627, %v634
    %v637 = vsub.f32 %v628, %v634
    %v638 = vsub.f32 %v629, %v634
    %v639 = vsub.f32 %v630, %v634
    %v640 = vsub.f32 %v631, %v634
    %v641 = vsub.f32 %v632, %v634
    %v642 = vsub.f32 %v633, %v634
    %v643 = vmax.f32 %v635, -64.0
    %v644 = vmax.f32 %v636, -64.0
    %v645 = vmax.f32 %v637, -64.0
    %v646 = vmax.f32 %v638, -64.0
    %v647 = vmax.f32 %v639, -64.0
    %v648 = vmax.f32 %v640, -64.0
    %v649 = vmax.f32 %v641, -64.0
    %v650 = vmax.f32 %v642, -64.0
    %v651 = vmin.f32 %v643, 64.0
    %v652 = vmin.f32 %v644, 64.0
    %v653 = vmin.f32 %v645, 64.0
    %v654 = vmin.f32 %v646, 64.0
    %v655 = vmin.f32 %v647, 64.0
    %v656 = vmin.f32 %v648, 64.0
    %v657 = vmin.f32 %v649, 64.0
    %v658 = vmin.f32 %v650, 64.0
    %v659 = vmul.f32 %v651, 1.442695
    %v660 = vpow.pop %v659
    %v661 = vmul.f32 %v652, 1.442695
    %v662 = vpow.pop %v661
    %v663 = vmul.f32 %v653, 1.442695
    %v664 = vpow.pop %v663
    %v665 = vmul.f32 %v654, 1.442695
    %v666 = vpow.pop %v665
    %v667 = vmul.f32 %v655, 1.442695
    %v668 = vpow.pop %v667
    %v669 = vmul.f32 %v656, 1.442695
    %v670 = vpow.pop %v669
    %v671 = vmul.f32 %v657, 1.442695
    %v672 = vpow.pop %v671
    %v673 = vmul.f32 %v658, 1.442695
    %v674 = vpow.pop %v673
    %v675 = vadd.f32 %v660, 1.0
    %v676 = vadd.f32 %v662, 1.0
    %v677 = vadd.f32 %v664, 1.0
    %v678 = vadd.f32 %v666, 1.0
    %v679 = vadd.f32 %v668, 1.0
    %v680 = vadd.f32 %v670, 1.0
    %v681 = vadd.f32 %v672, 1.0
    %v682 = vadd.f32 %v674, 1.0
    %v683 = vlog2.pop %v675
    %v684 = vmul.f32 %v683, 0.6931472
    %v685 = vlog2.pop %v676
    %v686 = vmul.f32 %v685, 0.6931472
    %v687 = vlog2.pop %v677
    %v688 = vmul.f32 %v687, 0.6931472
    %v689 = vlog2.pop %v678
    %v690 = vmul.f32 %v689, 0.6931472
    %v691 = vlog2.pop %v679
    %v692 = vmul.f32 %v691, 0.6931472
    %v693 = vlog2.pop %v680
    %v694 = vmul.f32 %v693, 0.6931472
    %v695 = vlog2.pop %v681
    %v696 = vmul.f32 %v695, 0.6931472
    %v697 = vlog2.pop %v682
    %v698 = vmul.f32 %v697, 0.6931472
    %v699 = vadd.f32 %v684, %v686
    %v700 = vadd.f32 %v699, %v688
    %v701 = vadd.f32 %v700, %v690
    %v702 = vadd.f32 %v701, %v692
    %v703 = vadd.f32 %v702, %v694
    %v704 = vadd.f32 %v703, %v696
    %v705 = vadd.f32 %v704, %v698
    %706 = vadd.xlane.f32.xlu0 %v705
    %v707 = vpop.xlane.xlu0 %706
    %v708 = vsel %vm618, %v635, 0.0
    %v709 = vsel %vm619, %v636, 0.0
    %v710 = vsel %vm620, %v637, 0.0
    %v711 = vsel %vm621, %v638, 0.0
    %v712 = vsel %vm622, %v639, 0.0
    %v713 = vsel %vm623, %v640, 0.0
    %v714 = vsel %vm624, %v641, 0.0
    %v715 = vsel %vm625, %v642, 0.0
    %v716 = vadd.f32 %v708, %v709
    %v717 = vadd.f32 %v716, %v710
    %v718 = vadd.f32 %v717, %v711
    %v719 = vadd.f32 %v718, %v712
    %v720 = vadd.f32 %v719, %v713
    %v721 = vadd.f32 %v720, %v714
    %v722 = vadd.f32 %v721, %v715
    %723 = vadd.xlane.f32.xlu0 %v722
    %v724 = vpop.xlane.xlu0 %723
    %v725 = vld [vmem:[%s3] sm:$0xff]
    %v727 = vlaneseq
    %v728 = vshrl.u32 %v727, 7
    %v729 = vsub.s32 0, %v728
    %v730 = vrot.slane %v725, %v729
    %v731 = vlaneseq
    %v732 = vshrl.u32 %v731, 7
    %v733 = vsub.s32 1, %v732
    %v734 = vrot.slane %v725, %v733
    %v735 = vlaneseq
    %v736 = vshrl.u32 %v735, 7
    %v737 = vsub.s32 2, %v736
    %v738 = vrot.slane %v725, %v737
    %v739 = vlaneseq
    %v740 = vshrl.u32 %v739, 7
    %v741 = vsub.s32 3, %v740
    %v742 = vrot.slane %v725, %v741
    %v743 = vlaneseq
    %v744 = vshrl.u32 %v743, 7
    %v745 = vsub.s32 4, %v744
    %v746 = vrot.slane %v725, %v745
    %v747 = vlaneseq
    %v748 = vshrl.u32 %v747, 7
    %v749 = vsub.s32 5, %v748
    %v750 = vrot.slane %v725, %v749
    %v751 = vlaneseq
    %v752 = vshrl.u32 %v751, 7
    %v753 = vsub.s32 6, %v752
    %v754 = vrot.slane %v725, %v753
    %v755 = vlaneseq
    %v756 = vshrl.u32 %v755, 7
    %v757 = vsub.s32 7, %v756
    %v758 = vrot.slane %v725, %v757
    %v767 = vsel %vm618, %v730, 0.0
    %v768 = vsel %vm619, %v734, 0.0
    %v769 = vsel %vm620, %v738, 0.0
    %v770 = vsel %vm621, %v742, 0.0
    %v771 = vsel %vm622, %v746, 0.0
    %v772 = vsel %vm623, %v750, 0.0
    %v773 = vsel %vm624, %v754, 0.0
    %v774 = vsel %vm625, %v758, 0.0
    %v775 = vadd.f32 %v767, %v768
    %v776 = vadd.f32 %v775, %v769
    %v777 = vadd.f32 %v776, %v770
    %v778 = vadd.f32 %v777, %v771
    %v779 = vadd.f32 %v778, %v772
    %v780 = vadd.f32 %v779, %v773
    %v781 = vadd.f32 %v780, %v774
    %782 = vadd.xlane.f32.xlu0 %v781
    %v783 = vpop.xlane.xlu0 %782
    %v784 = vsub.f32 %v724, %v783
    %v785 = vmax.f32 %v784, -64.0
    %v786 = vmin.f32 %v785, 64.0
    %v787 = vsub.f32 0.0, %v786
    %v788 = vmul.f32 %v787, 1.442695
    %v789 = vpow.pop %v788
    %v790 = vadd.f32 %v789, 1.0
    %v791 = vlog2.pop %v790
    %v792 = vmul.f32 %v791, 0.6931472
    %v793 = vmax.f32 %v724, -64.0
    %v794 = vmin.f32 %v793, 64.0
    %v795 = vmul.f32 %v794, 1.442695
    %v796 = vpow.pop %v795
    %v797 = vadd.f32 %v796, 1.0
    %v798 = vlog2.pop %v797
    %v799 = vmul.f32 %v798, 0.6931472
    %vm800 = vcmp.ge.s32.totalorder %v614, %v605
    %s801 = sadd.s32 0, 1
    %s802 = smul.u32 %s801, 1024
    %v803 = vstv %s802
    %vm804 = vcmp.lt.s32.totalorder %v614, %v803
    %vm805 = vmand %vm800, %vm804
    %v806 = vsub.f32 %v792, %v799
    %v807 = vsel %vm805, %v806, 0.0
    %p808 = scmp.eq.s32.totalorder 0, 0
    // Predicated region
    $region22: #{tpu_custom_call.1} parent=1 // pred_check
      %p809 = pneg %p808
    $region23: #{tpu_custom_call.1} parent=1 // pred_check_branch
      %811 = sbr.rel (%p809) target = $region25
    $region24: #{tpu_custom_call.1} parent=1 // pred_region
      %vm812 = vcmask 7168
      %813 = vst.msk [vmem:[%s6] sm:$0xff] %vm812, 0.0
    $region25: #{tpu_custom_call.1} parent=1 // pred_fallthru
      _
    %v814 = vld [vmem:[%s6] sm:$0xff]
    %v815 = vadd.f32 %v707, %v807
    %v816 = vadd.f32 %v814, %v815
    %vm817 = vcmask 7168
    %818 = vst.msk [vmem:[%s6] sm:$0xff] %vm817, %v816
    // Predicated region
    $region26: #{tpu_custom_call.1} parent=1 // pred_check
      _
    $region27: #{tpu_custom_call.1} parent=1 // pred_check_branch
      %820 = sbr.rel (0) target = $region29
    $region28: #{tpu_custom_call.1} parent=1 // pred_region
      %s822 = ssub.s32 1024, 1024
      %823 = vsyncadd [#allocation6], %s822
      %s825 = sshll.u32 [#allocation7], 4
      %s826 = int_to_ptr.vmem [resolvable:$true] %s825
      %828 = dma.vmem_to_hbm [thread:$0]  %s826, 1024, %s5, [#allocation6]
    $region29: #{tpu_custom_call.1} parent=1 // pred_fallthru
      _
    // Predicated region
    $region30: #{tpu_custom_call.1} parent=1 // pred_check
      _
    $region31: #{tpu_custom_call.1} parent=1 // pred_check_branch
      %830 = sbr.rel (0) target = $region33
    $region32: #{tpu_custom_call.1} parent=1 // pred_region
      _
    $region33: #{tpu_custom_call.1} parent=1 // pred_fallthru
      _
    // Predicated region
    $region34: #{tpu_custom_call.1} parent=1 // pred_check
      _
    $region35: #{tpu_custom_call.1} parent=1 // pred_check_branch
      %832 = sbr.rel (0) target = $region37
    $region36: #{tpu_custom_call.1} parent=1 // pred_region
      %833 = dma.done [#allocation6], 1024
    $region37: #{tpu_custom_call.1} parent=1 // pred_fallthru
      _
    // Predicated region
    $region38: #{tpu_custom_call.1} parent=1 // pred_check
      _
    $region39: #{tpu_custom_call.1} parent=1 // pred_check_branch
      %835 = sbr.rel (0) target = $region41
    $region40: #{tpu_custom_call.1} parent=1 // pred_region
      _
    $region41: #{tpu_custom_call.1} parent=1 // pred_fallthru
      _
    %836 = vsyncpa [#allocation5], 1
    %837 = vsyncpa [#allocation6], 1

</llo_original>
